<compile_context>
chip_gen: v6e
topology: v6e:2x2x1
jax: 0.10.0
libtpu: 0.0.40
codegen_flags: <defaults>
</compile_context>

<pallas_src>
import functools

import jax
import jax.numpy as jnp
import numpy as np
from jax.experimental import pallas as pl
from jax.experimental.pallas import tpu as pltpu

_BN_EPS = 1e-5
_KSIZE = 3


def _ceil_to(x, m):
    return -(-x // m) * m


# -----------------------------------------------------------------------------
# Lane-roll helper.  The kernel needs y[..., p] = x[..., p + s] ("shift data
# toward lane 0"); a one-time probe pins down pltpu.roll's rotation direction
# so the helper is convention-proof.
# -----------------------------------------------------------------------------
_ROLL_IS_NUMPY = None  # True iff pltpu.roll(x, s, axis) == np.roll(x, s, axis)


def _ensure_roll_convention():
    global _ROLL_IS_NUMPY
    if _ROLL_IS_NUMPY is None:
        def probe(x_ref, o_ref):
            o_ref[...] = pltpu.roll(x_ref[...], shift=1, axis=1)

        x = jax.lax.broadcasted_iota(jnp.int32, (8, 128), 1)
        out = pl.pallas_call(
            probe, out_shape=jax.ShapeDtypeStruct((8, 128), jnp.int32))(x)
        _ROLL_IS_NUMPY = bool(int(out[0, 1]) == 0)   # np.roll: out[:,1]==x[:,0]
    return _ROLL_IS_NUMPY


def _roll_left(x, s):
    """y[..., p] = x[..., (p + s) % n] via an XLU lane rotation."""
    if _ROLL_IS_NUMPY is None:
        raise RuntimeError("_ensure_roll_convention() must run before tracing")
    n = x.shape[-1]
    s = s % n
    if s == 0:
        return x
    shift = (n - s) if _ROLL_IS_NUMPY else s
    return pltpu.roll(x, shift=shift, axis=x.ndim - 1)


def _tensorcores_per_chip():
    """Best-effort TCs-per-chip query (v7x: 2).  Only affects batch tiling."""
    try:
        info = pltpu.get_tpu_info()
    except Exception:
        return 1
    for name in ("num_tensorcores", "tensorcores_per_chip", "num_cores",
                 "core_count"):
        v = getattr(info, name, None)
        if isinstance(v, int) and 0 < v <= 8:
            return v
    return 1


# -----------------------------------------------------------------------------
# Fused kernel body
# -----------------------------------------------------------------------------
def _make_fused_kernel(*, kin_w, sin_w, hk, wk):
    """conv+BN+ReLU (x2) -> depthwise xcorr -> 1x1-conv head, all in one body.

    kin_w / sin_w: row width (in strip lanes) of the template / search inputs.
    hk, wk:        spatial dims of the template feature (the xcorr kernel).
    """

    def kernel(k_ref, s_ref, wk_ref, bk_ref, ws_ref, bs_ref,
               w1_ref, b1_ref, w2_ref, b2_ref, o_ref):
        wkm, bk = wk_ref[...], bk_ref[...]
        wsm, bs = ws_ref[...], bs_ref[...]
        w1, b1 = w1_ref[...], b1_ref[...]
        w2, b2 = w2_ref[...], b2_ref[...]

        def conv3x3_bn_relu(x_strip, row_w, w_mat, bias):
            # x_strip: (Cpad, N) channel-major strip.  One im2col MXU matmul:
            # patches[t*Cpad + ci, p] = x_strip[ci, p + dh*row_w + dw].
            taps = [_roll_left(x_strip, dh * row_w + dw)
                    for dh in range(_KSIZE) for dw in range(_KSIZE)]
            patches = jnp.concatenate(taps, axis=0)   # (9*Cpad, N), tile-aligned
            y = jnp.dot(w_mat, patches, preferred_element_type=jnp.float32)
            return jnp.maximum(y + bias, 0.0)          # folded BN bias + ReLU

        for b in range(k_ref.shape[0]):                # static per-block batch
            kf = conv3x3_bn_relu(k_ref[b].astype(jnp.float32), kin_w, wkm, bk)
            sf = conv3x3_bn_relu(s_ref[b].astype(jnp.float32), sin_w, wsm, bs)

            # Depthwise cross-correlation: no channel contraction, so it stays
            # on the VPU; the (dh, dw) shifts are XLU lane-rolls of the dense
            # (C, Ns) strip and each kernel tap is a (C, 1) lane-broadcast.
            acc = None
            for dh in range(hk):
                for dw in range(wk):
                    s_sh = _roll_left(sf, dh * sin_w + dw)
                    i = dh * kin_w + dw
                    term = s_sh * kf[:, i:i + 1]
                    acc = term if acc is None else acc + term

            # Head: two channel-contraction matmuls on the lane-dense strip;
            # result is already NC(HW) oriented.
            h = jnp.maximum(
                jnp.dot(w1, acc, preferred_element_type=jnp.float32) + b1, 0.0)
            y = jnp.dot(w2, h, preferred_element_type=jnp.float32) + b2
            o_ref[b] = y.astype(o_ref.dtype)

    return kernel


# -----------------------------------------------------------------------------
# pallas_call wrapper (single fused launch)
# -----------------------------------------------------------------------------
def depthwise_xcorr_fused(kernel_nchw, search_nchw, folded, batch_per_step):
    B, cin, hki, wki = kernel_nchw.shape
    _, _, hsi, wsi = search_nchw.shape
    cout = folded["w2"].shape[0]

    hk, wk = hki - _KSIZE + 1, wki - _KSIZE + 1        # template feature dims
    hs, ws = hsi - _KSIZE + 1, wsi - _KSIZE + 1        # search feature dims
    ho, wo = hs - hk + 1, ws - wk + 1                  # xcorr / head output dims

    cpad = _ceil_to(cin, 8)                            # full sublane tile
    nk, ns = hki * wki, hsi * wsi
    nk_pad, ns_pad = _ceil_to(nk, 128), _ceil_to(ns, 128)
    bps = batch_per_step
    assert B % bps == 0
    assert folded["wk"].shape[1] == _KSIZE * _KSIZE * cpad

    # NCHW -> channel-major flattened strips; channel dim padded to a sublane
    # tile and the strip padded to whole lane tiles (cheap host-side XLA ops).
    k2 = jnp.pad(kernel_nchw.reshape(B, cin, nk),
                 ((0, 0), (0, cpad - cin), (0, nk_pad - nk)))
    s2 = jnp.pad(search_nchw.reshape(B, cin, ns),
                 ((0, 0), (0, cpad - cin), (0, ns_pad - ns)))

    kernel = _make_fused_kernel(kin_w=wki, sin_w=wsi, hk=hk, wk=wk)

    out_strip = pl.pallas_call(
        kernel,
        out_shape=jax.ShapeDtypeStruct((B, cout, ns_pad), jnp.float32),
        grid=(B // bps,),
        in_specs=[
            pl.BlockSpec((bps, cpad, nk_pad), lambda g: (g, 0, 0)),
            pl.BlockSpec((bps, cpad, ns_pad), lambda g: (g, 0, 0)),
            pl.BlockSpec(folded["wk"].shape, lambda g: (0, 0)),
            pl.BlockSpec(folded["bk"].shape, lambda g: (0, 0)),
            pl.BlockSpec(folded["ws"].shape, lambda g: (0, 0)),
            pl.BlockSpec(folded["bs"].shape, lambda g: (0, 0)),
            pl.BlockSpec(folded["w1"].shape, lambda g: (0, 0)),
            pl.BlockSpec(folded["b1"].shape, lambda g: (0, 0)),
            pl.BlockSpec(folded["w2"].shape, lambda g: (0, 0)),
            pl.BlockSpec(folded["b2"].shape, lambda g: (0, 0)),
        ],
        out_specs=pl.BlockSpec((bps, cout, ns_pad), lambda g: (g, 0, 0)),
        compiler_params=pltpu.CompilerParams(
            dimension_semantics=("parallel",)),
    )(k2, s2, folded["wk"], folded["bk"], folded["ws"], folded["bs"],
      folded["w1"], folded["b1"], folded["w2"], folded["b2"])

    # Strip positions are h*wsi + w; crop to the valid xcorr output window.
    out = out_strip[:, :, :ns].reshape(B, cout, hsi, wsi)
    return out[:, :, :ho, :wo]


@functools.partial(jax.jit, static_argnums=(3,))
def _forward_jit(folded, kernel_nchw, search_nchw, batch_per_step):
    return depthwise_xcorr_fused(kernel_nchw, search_nchw, folded,
                                 batch_per_step)


def depthwise_xcorr_forward(folded, kernel_nchw, search_nchw):
    """Entry point: one-time setup (roll-direction probe, TC count), then the
    jitted fused forward."""
    _ensure_roll_convention()
    B = kernel_nchw.shape[0]
    # v7x (2 TCs/chip): keep batch as a "parallel" grid axis, one element/core.
    # Single-TC v5e/v6e: fold the whole batch into one grid step.
    bps = 1 if (B > 1 and _tensorcores_per_chip() > 1) else B
    return _forward_jit(folded, kernel_nchw, search_nchw, bps)


# -----------------------------------------------------------------------------
# Parameters, one-time folding
# -----------------------------------------------------------------------------
def _bn_fold(gamma, beta, mean, var, eps=_BN_EPS):
    scale = gamma / jnp.sqrt(var + eps)
    bias = beta - mean * scale
    return scale, bias


def init_params(key, in_channels, hidden, out_channels, ksize=_KSIZE):
    ks = jax.random.split(key, 8)

    def bn_params(k, c):
        k1, k2, k3, k4 = jax.random.split(k, 4)
        gamma = 1.0 + 0.1 * jax.random.normal(k1, (c,), jnp.float32)
        beta = 0.1 * jax.random.normal(k2, (c,), jnp.float32)
        mean = 0.1 * jax.random.normal(k3, (c,), jnp.float32)
        var = jax.random.uniform(k4, (c,), jnp.float32, minval=0.5, maxval=1.5)
        return (gamma, beta, mean, var)

    return {
        # PyTorch OIHW conv weights
        "conv_kernel_w": 0.1 * jax.random.normal(ks[0], (hidden, in_channels, ksize, ksize), jnp.float32),
        "bn_kernel": bn_params(ks[1], hidden),
        "conv_search_w": 0.1 * jax.random.normal(ks[2], (hidden, in_channels, ksize, ksize), jnp.float32),
        "bn_search": bn_params(ks[3], hidden),
        "head_w1": 0.1 * jax.random.normal(ks[4], (hidden, hidden, 1, 1), jnp.float32),
        "bn_head": bn_params(ks[5], hidden),
        "head_w2": 0.1 * jax.random.normal(ks[6], (out_channels, hidden, 1, 1), jnp.float32),
        "head_b2": 0.1 * jax.random.normal(ks[7], (out_channels,), jnp.float32),
    }


def fold_params(params):
    """One-time host-side weight prep: BN folding + im2col / channel-major layout.
    TODO(synk): training-mode BatchNorm (batch statistics) is not implemented;
    eval-mode running stats are folded into the weights here."""
    sk, bk = _bn_fold(*params["bn_kernel"])
    ss, bs = _bn_fold(*params["bn_search"])
    s1, b1 = _bn_fold(*params["bn_head"])

    def conv_to_im2col(w_oihw, scale):
        o, i, kh, kw = w_oihw.shape
        cpad = _ceil_to(i, 8)
        wt = jnp.transpose(w_oihw, (0, 2, 3, 1))                   # (O,KH,KW,I)
        wt = jnp.pad(wt, ((0, 0), (0, 0), (0, 0), (0, cpad - i)))  # pad Cin
        return (wt.reshape(o, kh * kw * cpad) * scale[:, None]).astype(jnp.float32)

    return {
        "wk": conv_to_im2col(params["conv_kernel_w"], sk),
        "bk": bk[:, None].astype(jnp.float32),
        "ws": conv_to_im2col(params["conv_search_w"], ss),
        "bs": bs[:, None].astype(jnp.float32),
        "w1": (params["head_w1"][:, :, 0, 0] * s1[:, None]).astype(jnp.float32),
        "b1": b1[:, None].astype(jnp.float32),
        "w2": params["head_w2"][:, :, 0, 0].astype(jnp.float32),
        "b2": params["head_b2"][:, None].astype(jnp.float32),
    }


# -----------------------------------------------------------------------------
# Pure-JAX reference (PyTorch semantics, eval-mode BN) for a sanity check
# -----------------------------------------------------------------------------
def ref_forward(params, kernel_nchw, search_nchw):
    def conv_bn_relu(x, w, bn):
        gamma, beta, mean, var = bn
        y = jax.lax.conv_general_dilated(x, w, (1, 1), "VALID",
                                         dimension_numbers=("NCHW", "OIHW", "NCHW"))
        scale = gamma / jnp.sqrt(var + _BN_EPS)
        bias = beta - mean * scale
        return jnp.maximum(y * scale[None, :, None, None] + bias[None, :, None, None], 0.0)

    kf = conv_bn_relu(kernel_nchw, params["conv_kernel_w"], params["bn_kernel"])
    sf = conv_bn_relu(search_nchw, params["conv_search_w"], params["bn_search"])

    B, C, Hk, Wk = kf.shape
    x = sf.reshape(1, B * C, sf.shape[2], sf.shape[3])
    k = kf.reshape(B * C, 1, Hk, Wk)
    feat = jax.lax.conv_general_dilated(x, k, (1, 1), "VALID",
                                        dimension_numbers=("NCHW", "OIHW", "NCHW"),
                                        feature_group_count=B * C)
    feat = feat.reshape(B, C, feat.shape[2], feat.shape[3])

    gamma, beta, mean, var = params["bn_head"]
    scale = gamma / jnp.sqrt(var + _BN_EPS)
    bias = beta - mean * scale
    h = jnp.einsum("bchw,oc->bohw", feat, params["head_w1"][:, :, 0, 0])
    h = jnp.maximum(h * scale[None, :, None, None] + bias[None, :, None, None], 0.0)
    y = jnp.einsum("bchw,oc->bohw", h, params["head_w2"][:, :, 0, 0])
    return y + params["head_b2"][None, :, None, None]


if __name__ == "__main__":
    key = jax.random.PRNGKey(0)
    in_channels, hidden, out_channels = 4, 32, 8
    B = 2

    kp, kkern, ksearch = jax.random.split(key, 3)
    params = init_params(kp, in_channels, hidden, out_channels)
    kernel_in = jax.random.normal(kkern, (B, in_channels, 8, 8), jnp.float32)      # template
    search_in = jax.random.normal(ksearch, (B, in_channels, 16, 16), jnp.float32)  # search

    folded = fold_params(params)     # one-time weight prep (outside hot path)
    out = depthwise_xcorr_forward(folded, kernel_in, search_in)
    out = jax.block_until_ready(out)

    assert out.shape == (B, out_channels, 9, 9), out.shape
    ref = ref_forward(params, kernel_in, search_in)
    np.testing.assert_allclose(np.asarray(out), np.asarray(ref), rtol=2e-3, atol=2e-3)

    print("KERNEL_OK")
</pallas_src>

<mosaic_0001>
module attributes {stable_mosaic.version = 11 : i64} {
  func.func @probe(%arg0: memref<8x128xi32, #tpu.memory_space<vmem>>, %arg1: memref<8x128xi32, #tpu.memory_space<vmem>>) attributes {dimension_semantics = [], scalar_prefetch = 0 : i64, scratch_operands = 0 : i64, tpu.core_type = #tpu.core_type<tc>} {
    %c0 = arith.constant 0 : index
    %c0_0 = arith.constant 0 : index
    %0 = vector.load %arg0[%c0, %c0_0] : memref<8x128xi32, #tpu.memory_space<vmem>>, vector<8x128xi32>
    %c1_i32 = arith.constant 1 : i32
    %1 = tpu.dynamic_rotate %0 by %c1_i32 dim 1 : vector<8x128xi32>, i32 -> vector<8x128xi32>
    %c0_1 = arith.constant 0 : index
    %c0_2 = arith.constant 0 : index
    %2 = vector.load %arg1[%c0_1, %c0_2] : memref<8x128xi32, #tpu.memory_space<vmem>>, vector<8x128xi32>
    tpu.vector_store %arg1[%c0_1, %c0_2], %1 {strides = array<i32>} : memref<8x128xi32, #tpu.memory_space<vmem>>, vector<8x128xi32>,
    return
  }
}

</mosaic_0001>

<llo_original>
// kernel: tpu_custom_call.1
$region0: #{tpu_custom_call.1}
  #allocation0 [shape = 'u32[]', space=smem, size = 0x4, offset = 0x4, fixed_abs, tag = 'smem constant byte address 0x4 - core index']
  #allocation1 [shape = 'u32[144,128]{1,0:T(1,128)}', space=vmem, size = 0x12000, scoped, tag = 'internal scratch']
  %s0 = inlined_call_operand.hbm [shape: s32[8,128], index: 0, kind: input, shape index: {}]
  %s1 = inlined_call_operand.hbm [shape: s32[8,128], index: 1, kind: output, shape index: {}]
  %s2 = sld [smem:[#allocation0]]
  $region18: #{tpu_custom_call.1} parent=0
    _
  %s4 = ssub.s32 1, %s2
  %s5 = scalar_select 0, %s4, %s2
  $region1: #{tpu_custom_call.1} parent=0
    #allocation2 [shape = 'u8[4096]{0}', space=vmem, size = 0x1000, scoped, tag = 'input window, operand 0, single buffered']
    #allocation3 [shape = 's32[1]{0}', space=sflag, size = 0x4, scoped, tag = 'scoped memory for tpu_custom_call.1']
    #allocation4 [shape = 's32[1]{0}', space=sflag, size = 0x4, scoped, tag = 'scoped memory for tpu_custom_call.1']
    #allocation5 [shape = 'u8[4096]{0}', space=vmem, size = 0x1000, scoped, tag = 'output window, operand 0, single buffered']
    %6 = vsyncpa [#allocation3], 0
    %7 = vsyncpa [#allocation4], 0
    // Predicated region
    $region2: #{tpu_custom_call.1} parent=1 // pred_check
      _
    $region3: #{tpu_custom_call.1} parent=1 // pred_check_branch
      %9 = sbr.rel (0) target = $region5
    $region4: #{tpu_custom_call.1} parent=1 // pred_region
      %s11 = ssub.s32 128, 128
      %12 = vsyncadd [#allocation3], %s11
      %s14 = sshll.u32 [#allocation2], 4
      %s15 = int_to_ptr.vmem [resolvable:$true] %s14
      %17 = dma.hbm_to_vmem [thread:$0]  %s0, 128, %s15, [#allocation3]
    $region5: #{tpu_custom_call.1} parent=1 // pred_fallthru
      _
    // Predicated region
    $region6: #{tpu_custom_call.1} parent=1 // pred_check
      _
    $region7: #{tpu_custom_call.1} parent=1 // pred_check_branch
      %19 = sbr.rel (0) target = $region9
    $region8: #{tpu_custom_call.1} parent=1 // pred_region
      %20 = dma.done [#allocation3], 128
    $region9: #{tpu_custom_call.1} parent=1 // pred_fallthru
      _
    %v21 = vld [vmem:[#allocation2] sm:$0xff]
    %22 = vrot.lane.b32.xlu0 %v21, 1
    %v23 = vpop.permute.xlu0 %22
    %24 = vst [vmem:[#allocation5] sm:$0xff] %v23
    // Predicated region
    $region10: #{tpu_custom_call.1} parent=1 // pred_check
      _
    $region11: #{tpu_custom_call.1} parent=1 // pred_check_branch
      %26 = sbr.rel (0) target = $region13
    $region12: #{tpu_custom_call.1} parent=1 // pred_region
      %s28 = ssub.s32 128, 128
      %29 = vsyncadd [#allocation4], %s28
      %s31 = sshll.u32 [#allocation5], 4
      %s32 = int_to_ptr.vmem [resolvable:$true] %s31
      %34 = dma.vmem_to_hbm [thread:$0]  %s32, 128, %s1, [#allocation4]
    $region13: #{tpu_custom_call.1} parent=1 // pred_fallthru
      _
    // Predicated region
    $region14: #{tpu_custom_call.1} parent=1 // pred_check
      _
    $region15: #{tpu_custom_call.1} parent=1 // pred_check_branch
      %36 = sbr.rel (0) target = $region17
    $region16: #{tpu_custom_call.1} parent=1 // pred_region
      %37 = dma.done [#allocation4], 128
    $region17: #{tpu_custom_call.1} parent=1 // pred_fallthru
      _
    %38 = vsyncpa [#allocation3], 1
    %39 = vsyncpa [#allocation4], 1

</llo_original>
